<compile_context>
chip_gen: v7x
topology: tpu7x:2x2x1
jax: 0.10.0
libtpu: 0.0.40
codegen_flags: <defaults>
</compile_context>

<pallas_src>
import functools

import jax
import jax.numpy as jnp
from jax.experimental import pallas as pl
from jax.experimental.pallas import tpu as pltpu

LANES = 128
SUBLANES = 8
ROW_ALIGN = 32                 # covers (8,128) f32, (16,128) bf16, (32,128) int8 tiling
ROW_CHUNK = 512                # in-kernel compute sub-tile: 512 x 128 x 4B = 256 KiB f32
TARGET_BLOCK_BYTES = 4 << 20   # ~4 MiB DMA block for the widest input dtype
MAX_SPLITS = 2                 # at most one partial-accumulator slot per TensorCore


def _round_up(x, m):
    return ((x + m - 1) // m) * m


def _num_tensorcores():
    """Best-effort TensorCores-per-chip; falls back to 1 (always correct)."""
    try:
        info = pltpu.get_tpu_info()
        for attr in ("num_cores", "core_count", "num_tensorcores", "tensorcores_per_chip"):
            v = getattr(info, attr, None)
            if isinstance(v, int) and v > 0:
                return v
    except Exception:
        pass
    return 1


def _dice_partials_kernel(x_ref, t_ref, inter_ref, denom_ref, *, chunk_rows, n_chunks):
    """Accumulates per-lane partial sums of x*t and (x^2 + t) into the outputs."""
    i = pl.program_id(1)   # trailing ("arbitrary") reduction axis

    @pl.when(i == 0)
    def _():
        inter_ref[...] = jnp.zeros_like(inter_ref)
        denom_ref[...] = jnp.zeros_like(denom_ref)

    sub = chunk_rows // SUBLANES

    def body(c, carry):
        inter_acc, denom_acc = carry
        r0 = pl.multiple_of(c * chunk_rows, chunk_rows)
        # Cast to f32 in-kernel; inputs stay narrow in HBM (required on v5e for bf16).
        x = x_ref[pl.ds(r0, chunk_rows), :].astype(jnp.float32)
        t = (t_ref[pl.ds(r0, chunk_rows), :].astype(jnp.float32) > 0.5).astype(jnp.float32)
        # sigmoid(x) == 0.5*(tanh(x/2)+1): one EUP transcendental, no VALU divide.
        x = 0.5 * (jnp.tanh(0.5 * x) + 1.0)
        # vreg-wise VPU adds only; no per-step cross-lane reduce, no SMEM scalars.
        inter_acc = inter_acc + (x * t).reshape(sub, SUBLANES, LANES).sum(axis=0)
        # t is binary, so t^2 == t; fold x^2 + t^2 into one accumulator.
        denom_acc = denom_acc + (x * x + t).reshape(sub, SUBLANES, LANES).sum(axis=0)
        return inter_acc, denom_acc

    zero = jnp.zeros((SUBLANES, LANES), jnp.float32)
    inter_p, denom_p = jax.lax.fori_loop(
        0, n_chunks, body, (zero, zero), unroll=bool(n_chunks <= 4))
    inter_ref[...] += inter_p
    denom_ref[...] += denom_p


def dice_loss_pallas(inp, tgt, weight=1.0, block_rows=None):
    """DiceLoss.forward(input, target, weight) as a Pallas TPU kernel."""
    n = inp.size
    assert tgt.size == n

    # Flatten row-major (same order as torch .view(-1)); keep native dtypes.
    x_flat = inp.reshape(-1)
    t_flat = tgt.reshape(-1)

    rows = pl.cdiv(n, LANES)
    rows_aligned = _round_up(rows, ROW_ALIGN)
    max_item = max(x_flat.dtype.itemsize, t_flat.dtype.itemsize)

    if block_rows is None:
        # Size the DMA block in bytes (~4 MiB for the widest input) independent of
        # dtype, so the per-grid-step overhead stays amortized for narrow dtypes.
        target_rows = max(
            ROW_CHUNK,
            (TARGET_BLOCK_BYTES // (LANES * max_item)) // ROW_CHUNK * ROW_CHUNK)
        if rows_aligned <= ROW_CHUNK:
            block_rows = rows_aligned
        else:
            block_rows = min(_round_up(rows_aligned, ROW_CHUNK), target_rows)
    assert block_rows % ROW_ALIGN == 0
    chunk_rows = min(ROW_CHUNK, block_rows)
    assert block_rows % chunk_rows == 0
    n_chunks = block_rows // chunk_rows

    steps_total = pl.cdiv(rows_aligned, block_rows)
    num_splits = (MAX_SPLITS
                  if (_num_tensorcores() >= MAX_SPLITS and steps_total >= MAX_SPLITS)
                  else 1)
    steps_per_split = pl.cdiv(steps_total, num_splits)
    rows_pad = num_splits * steps_per_split * block_rows
    pad = rows_pad * LANES - n

    if pad:
        # Negative-pad scheme (no in-kernel tail mask): sigmoid(-1e4) == 0 exactly,
        # so padded logits contribute 0 to both x*t and x^2; padded targets are 0.
        x_flat = jnp.pad(x_flat, (0, pad), constant_values=-1e4)
        t_flat = jnp.pad(t_flat, (0, pad), constant_values=0)
    x2d = x_flat.reshape(rows_pad, LANES)
    t2d = t_flat.reshape(rows_pad, LANES)

    kernel = functools.partial(
        _dice_partials_kernel, chunk_rows=chunk_rows, n_chunks=n_chunks)

    in_spec = pl.BlockSpec((block_rows, LANES),
                           lambda s, i: (s * steps_per_split + i, 0))
    acc_shape = jax.ShapeDtypeStruct((num_splits, SUBLANES, LANES), jnp.float32)
    acc_spec = pl.BlockSpec((None, SUBLANES, LANES), lambda s, i: (s, 0, 0))

    # Explicit VMEM budget: double-buffered inputs + headroom (v5e default is 16 MiB).
    in_block_bytes = block_rows * LANES * (x2d.dtype.itemsize + t2d.dtype.itemsize)
    vmem_limit = int(min(48 << 20, max(16 << 20, 2 * in_block_bytes + (8 << 20))))
    bytes_accessed = (x2d.size * x2d.dtype.itemsize + t2d.size * t2d.dtype.itemsize
                      + 2 * num_splits * SUBLANES * LANES * 4)

    # TODO(synk): verify in an xprof trace that the leading "parallel" axis shards
    # across v7x's two TensorCores; if not, switch it to pltpu.CORE_PARALLEL.
    inter_p, denom_p = pl.pallas_call(
        kernel,
        out_shape=(acc_shape, acc_shape),
        grid_spec=pltpu.PrefetchScalarGridSpec(
            num_scalar_prefetch=0,
            grid=(num_splits, steps_per_split),
            in_specs=[in_spec, in_spec],
            out_specs=(acc_spec, acc_spec),
        ),
        compiler_params=pltpu.CompilerParams(
            dimension_semantics=("parallel", "arbitrary"),
            vmem_limit_bytes=vmem_limit,
        ),
        cost_estimate=pl.CostEstimate(
            flops=6 * n, transcendentals=n, bytes_accessed=bytes_accessed),
    )(x2d, t2d)

    # Tiny JAX epilogue: cross-lane reduce + dice math. `weight` is applied here,
    # so different weights never force a kernel recompile.
    smooth = 1e-05
    inter = jnp.sum(inter_p)
    denom = jnp.sum(denom_p)
    dice = (2.0 * weight * inter + smooth) / (denom + smooth)
    return (1.0 - dice).astype(jnp.float32)


def dice_loss_ref(inp, tgt, weight=1.0):
    """Pure-JAX reference matching the PyTorch module exactly."""
    smooth = 1e-05
    x = jax.nn.sigmoid(inp.astype(jnp.float32)).reshape(-1)
    t = (tgt.astype(jnp.float32) > 0.5).astype(jnp.float32).reshape(-1)
    inter = jnp.sum(x * t)
    dice = (2.0 * weight * inter + smooth) / (
        jnp.sum(x * x) + jnp.sum(t * t) + smooth)
    return 1.0 - dice


if __name__ == "__main__":
    key = jax.random.PRNGKey(0)
    k1, k2 = jax.random.split(key)

    # NCHW logits + binary-ish mask, as the PyTorch module would receive.
    x = jax.random.normal(k1, (2, 4, 16, 16), dtype=jnp.float32)
    target = (jax.random.uniform(k2, (2, 4, 16, 16)) > 0.5).astype(jnp.float32)
    loss = jax.block_until_ready(dice_loss_pallas(x, target, weight=1.0))
    ref = dice_loss_ref(x, target, weight=1.0)
    assert jnp.allclose(loss, ref, atol=2e-5, rtol=1e-5), (loss, ref)

    # Ragged size, narrow (bf16) logits AND bf16 target, non-unit weight ->
    # exercises negative-pad tail handling and the in-kernel f32 cast path.
    k3, k4 = jax.random.split(k2)
    x2 = jax.random.normal(k3, (3, 5, 33, 17), dtype=jnp.bfloat16)
    t2 = (jax.random.uniform(k4, (3, 5, 33, 17)) > 0.5).astype(jnp.bfloat16)
    loss2 = jax.block_until_ready(dice_loss_pallas(x2, t2, weight=0.7))
    ref2 = dice_loss_ref(x2, t2, weight=0.7)
    assert jnp.allclose(loss2, ref2, atol=1e-4, rtol=1e-4), (loss2, ref2)

    # Small block_rows override -> exercises the multi-step reduction, the
    # resident-accumulator init/accumulate path and fully-padded tail tiles.
    k5, k6 = jax.random.split(k4)
    x3 = jax.random.normal(k5, (4, 8, 32, 33), dtype=jnp.float32)
    t3 = (jax.random.uniform(k6, (4, 8, 32, 33)) > 0.5).astype(jnp.float32)
    loss3 = jax.block_until_ready(dice_loss_pallas(x3, t3, weight=1.0, block_rows=64))
    ref3 = dice_loss_ref(x3, t3, weight=1.0)
    assert jnp.allclose(loss3, ref3, atol=1e-4, rtol=1e-4), (loss3, ref3)

    print("KERNEL_OK")
</pallas_src>

<mosaic_0001>
module attributes {stable_mosaic.version = 11 : i64} {
  func.func @_dice_partials_kernel(%arg0: i32, %arg1: i32, %arg2: memref<32x128xf32, #tpu.memory_space<vmem>>, %arg3: memref<32x128xf32, #tpu.memory_space<vmem>>, %arg4: memref<1x8x128xf32, #tpu.memory_space<vmem>>, %arg5: memref<1x8x128xf32, #tpu.memory_space<vmem>>) attributes {dimension_semantics = [#tpu.dimension_semantics<parallel>, #tpu.dimension_semantics<arbitrary>], iteration_bounds = array<i64: 1, 1>, scalar_prefetch = 0 : i64, scratch_operands = 0 : i64, tpu.core_type = #tpu.core_type<tc>, window_params = [{transform_indices = @transform_0, window_bounds = array<i64: 32, 128>}, {transform_indices = @transform_1, window_bounds = array<i64: 32, 128>}, {transform_indices = @transform_2, window_bounds = array<i64: 1, 8, 128>}, {transform_indices = @transform_3, window_bounds = array<i64: 1, 8, 128>}]} {
    %c0_i32 = arith.constant 0 : i32
    %0 = arith.cmpi eq, %arg1, %c0_i32 : i32
    %1 = arith.extui %0 : i1 to i32
    %c0_i32_0 = arith.constant 0 : i32
    %2 = arith.cmpi ne, %1, %c0_i32_0 : i32
    scf.if %2 {
      %cst_21 = arith.constant 0.000000e+00 : f32
      %42 = vector.broadcast %cst_21 : f32 to vector<8x128xf32>
      %c0_22 = arith.constant 0 : index
      %c0_23 = arith.constant 0 : index
      %c0_24 = arith.constant 0 : index
      %43 = vector.load %arg4[%c0_22, %c0_23, %c0_24] : memref<1x8x128xf32, #tpu.memory_space<vmem>>, vector<1x8x128xf32>
      %44 = vector.shape_cast %43 : vector<1x8x128xf32> to vector<8x128xf32>
      %45 = vector.shape_cast %42 : vector<8x128xf32> to vector<1x8x128xf32>
      tpu.vector_store %arg4[%c0_22, %c0_23, %c0_24], %45 {strides = array<i32>} : memref<1x8x128xf32, #tpu.memory_space<vmem>>, vector<1x8x128xf32>,
      %cst_25 = arith.constant 0.000000e+00 : f32
      %46 = vector.broadcast %cst_25 : f32 to vector<8x128xf32>
      %c0_26 = arith.constant 0 : index
      %c0_27 = arith.constant 0 : index
      %c0_28 = arith.constant 0 : index
      %47 = vector.load %arg5[%c0_26, %c0_27, %c0_28] : memref<1x8x128xf32, #tpu.memory_space<vmem>>, vector<1x8x128xf32>
      %48 = vector.shape_cast %47 : vector<1x8x128xf32> to vector<8x128xf32>
      %49 = vector.shape_cast %46 : vector<8x128xf32> to vector<1x8x128xf32>
      tpu.vector_store %arg5[%c0_26, %c0_27, %c0_28], %49 {strides = array<i32>} : memref<1x8x128xf32, #tpu.memory_space<vmem>>, vector<1x8x128xf32>,
    } else {
    }
    %cst = arith.constant 0.000000e+00 : f32
    %3 = vector.broadcast %cst : f32 to vector<8x128xf32>
    %c0_i32_1 = arith.constant 0 : i32
    %c32_i32 = arith.constant 32 : i32
    %4 = arith.muli %c0_i32_1, %c32_i32 : i32
    %5 = tpu.assume_multiple %4, 32 : i32
    %6 = arith.index_cast %5 : i32 to index
    %c0 = arith.constant 0 : index
    %7 = vector.load %arg2[%6, %c0] : memref<32x128xf32, #tpu.memory_space<vmem>>, vector<32x128xf32>
    %8 = arith.index_cast %5 : i32 to index
    %c0_2 = arith.constant 0 : index
    %9 = vector.load %arg3[%8, %c0_2] : memref<32x128xf32, #tpu.memory_space<vmem>>, vector<32x128xf32>
    %cst_3 = arith.constant 5.000000e-01 : f32
    %10 = vector.broadcast %cst_3 : f32 to vector<32x128xf32>
    %11 = arith.cmpf ogt, %9, %10 : vector<32x128xf32>
    %12 = arith.extui %11 : vector<32x128xi1> to vector<32x128xi32>
    %13 = arith.sitofp %12 : vector<32x128xi32> to vector<32x128xf32>
    %cst_4 = arith.constant 5.000000e-01 : f32
    %14 = vector.broadcast %cst_4 : f32 to vector<32x128xf32>
    %15 = arith.mulf %14, %7 : vector<32x128xf32>
    %16 = math.tanh %15 : vector<32x128xf32>
    %cst_5 = arith.constant 1.000000e+00 : f32
    %17 = vector.broadcast %cst_5 : f32 to vector<32x128xf32>
    %18 = arith.addf %16, %17 : vector<32x128xf32>
    %cst_6 = arith.constant 5.000000e-01 : f32
    %19 = vector.broadcast %cst_6 : f32 to vector<32x128xf32>
    %20 = arith.mulf %19, %18 : vector<32x128xf32>
    %21 = arith.mulf %20, %13 : vector<32x128xf32>
    %22 = vector.shape_cast %21 : vector<32x128xf32> to vector<4x8x128xf32>
    %cst_7 = arith.constant dense<0.000000e+00> : vector<8x128xf32>
    %23 = vector.multi_reduction <add>, %22, %cst_7 [0] : vector<4x8x128xf32> to vector<8x128xf32>
    %24 = arith.addf %3, %23 : vector<8x128xf32>
    %25 = arith.mulf %20, %20 : vector<32x128xf32>
    %26 = arith.addf %25, %13 : vector<32x128xf32>
    %27 = vector.shape_cast %26 : vector<32x128xf32> to vector<4x8x128xf32>
    %cst_8 = arith.constant dense<0.000000e+00> : vector<8x128xf32>
    %28 = vector.multi_reduction <add>, %27, %cst_8 [0] : vector<4x8x128xf32> to vector<8x128xf32>
    %29 = arith.addf %3, %28 : vector<8x128xf32>
    %c1_i32 = arith.constant 1 : i32
    %c0_9 = arith.constant 0 : index
    %c0_10 = arith.constant 0 : index
    %c0_11 = arith.constant 0 : index
    %30 = vector.load %arg4[%c0_9, %c0_10, %c0_11] : memref<1x8x128xf32, #tpu.memory_space<vmem>>, vector<1x8x128xf32>
    %31 = vector.shape_cast %30 : vector<1x8x128xf32> to vector<8x128xf32>
    %32 = arith.addf %31, %24 : vector<8x128xf32>
    %c0_12 = arith.constant 0 : index
    %c0_13 = arith.constant 0 : index
    %c0_14 = arith.constant 0 : index
    %33 = vector.load %arg4[%c0_12, %c0_13, %c0_14] : memref<1x8x128xf32, #tpu.memory_space<vmem>>, vector<1x8x128xf32>
    %34 = vector.shape_cast %33 : vector<1x8x128xf32> to vector<8x128xf32>
    %35 = vector.shape_cast %32 : vector<8x128xf32> to vector<1x8x128xf32>
    tpu.vector_store %arg4[%c0_12, %c0_13, %c0_14], %35 {strides = array<i32>} : memref<1x8x128xf32, #tpu.memory_space<vmem>>, vector<1x8x128xf32>,
    %c0_15 = arith.constant 0 : index
    %c0_16 = arith.constant 0 : index
    %c0_17 = arith.constant 0 : index
    %36 = vector.load %arg5[%c0_15, %c0_16, %c0_17] : memref<1x8x128xf32, #tpu.memory_space<vmem>>, vector<1x8x128xf32>
    %37 = vector.shape_cast %36 : vector<1x8x128xf32> to vector<8x128xf32>
    %38 = arith.addf %37, %29 : vector<8x128xf32>
    %c0_18 = arith.constant 0 : index
    %c0_19 = arith.constant 0 : index
    %c0_20 = arith.constant 0 : index
    %39 = vector.load %arg5[%c0_18, %c0_19, %c0_20] : memref<1x8x128xf32, #tpu.memory_space<vmem>>, vector<1x8x128xf32>
    %40 = vector.shape_cast %39 : vector<1x8x128xf32> to vector<8x128xf32>
    %41 = vector.shape_cast %38 : vector<8x128xf32> to vector<1x8x128xf32>
    tpu.vector_store %arg5[%c0_18, %c0_19, %c0_20], %41 {strides = array<i32>} : memref<1x8x128xf32, #tpu.memory_space<vmem>>, vector<1x8x128xf32>,
    return
  }
  func.func @transform_0(%arg0: i32, %arg1: i32) -> (i32, i32) {
    %c1_i32 = arith.constant 1 : i32
    %0 = arith.muli %arg0, %c1_i32 : i32
    %1 = arith.addi %0, %arg1 : i32
    %c0_i32 = arith.constant 0 : i32
    %c0_i32_0 = arith.constant 0 : i32
    return %1, %c0_i32 : i32, i32
  }
  func.func @transform_1(%arg0: i32, %arg1: i32) -> (i32, i32) {
    %c1_i32 = arith.constant 1 : i32
    %0 = arith.muli %arg0, %c1_i32 : i32
    %1 = arith.addi %0, %arg1 : i32
    %c0_i32 = arith.constant 0 : i32
    %c0_i32_0 = arith.constant 0 : i32
    return %1, %c0_i32 : i32, i32
  }
  func.func @transform_2(%arg0: i32, %arg1: i32) -> (i32, i32, i32) {
    %c0_i32 = arith.constant 0 : i32
    %c0_i32_0 = arith.constant 0 : i32
    %c0_i32_1 = arith.constant 0 : i32
    return %arg0, %c0_i32, %c0_i32_0 : i32, i32, i32
  }
  func.func @transform_3(%arg0: i32, %arg1: i32) -> (i32, i32, i32) {
    %c0_i32 = arith.constant 0 : i32
    %c0_i32_0 = arith.constant 0 : i32
    %c0_i32_1 = arith.constant 0 : i32
    return %arg0, %c0_i32, %c0_i32_0 : i32, i32, i32
  }
}

</mosaic_0001>

<llo_original>
// kernel: tpu_custom_call.1
$region0: #{tpu_custom_call.1}
  #allocation0 [shape = 'u32[]', space=smem, size = 0x4, offset = 0x4, fixed_abs, tag = 'smem constant byte address 0x4 - core index']
  #allocation1 [shape = 'u32[144,128]{1,0:T(1,128)}', space=vmem, size = 0x12000, scoped, tag = 'internal scratch']
  %s0 = inlined_call_operand.hbm [shape: f32[32,128], index: 0, kind: input, shape index: {}]
  %s1 = inlined_call_operand.hbm [shape: f32[32,128], index: 1, kind: input, shape index: {}]
  %s2 = inlined_call_operand.hbm [shape: f32[1,8,128], index: 2, kind: output, shape index: {0}]
  %s3 = inlined_call_operand.hbm [shape: f32[1,8,128], index: 3, kind: output, shape index: {1}]
  %4 = xla_tuple %s2, %s3
  %s5 = sld [smem:[#allocation0]]
  $region38: #{tpu_custom_call.1} parent=0
    _
  %s7 = ssub.s32 1, %s5
  %s8 = scalar_select 0, %s7, %s5
  $region1: #{tpu_custom_call.1} parent=0
    #allocation2 [shape = 'u8[16384]{0}', space=vmem, size = 0x4000, scoped, tag = 'input window, operand 0, single buffered']
    #allocation3 [shape = 's32[1]{0}', space=sflag, size = 0x4, scoped, tag = 'scoped memory for tpu_custom_call.1']
    #allocation4 [shape = 's32[1]{0}', space=sflag, size = 0x4, scoped, tag = 'scoped memory for tpu_custom_call.1']
    #allocation5 [shape = 'u8[16384]{0}', space=vmem, size = 0x4000, scoped, tag = 'input window, operand 1, single buffered']
    #allocation6 [shape = 's32[1]{0}', space=sflag, size = 0x4, scoped, tag = 'scoped memory for tpu_custom_call.1']
    #allocation7 [shape = 'u8[4096]{0}', space=vmem, size = 0x1000, scoped, tag = 'output window, operand 0, single buffered']
    #allocation8 [shape = 'u8[4096]{0}', space=vmem, size = 0x1000, scoped, tag = 'output window, operand 1, single buffered']
    #allocation9 [shape = 's32[1]{0}', space=sflag, size = 0x4, scoped, tag = 'scoped memory for tpu_custom_call.1']
    %9 = vsyncpa [#allocation3], 0
    %10 = vsyncpa [#allocation6], 0
    %11 = vsyncpa [#allocation4], 0
    %12 = vsyncpa [#allocation9], 0
    // Predicated region
    $region2: #{tpu_custom_call.1} parent=1 // pred_check
      _
    $region3: #{tpu_custom_call.1} parent=1 // pred_check_branch
      %14 = sbr.rel (0) target = $region5
    $region4: #{tpu_custom_call.1} parent=1 // pred_region
      %s15 = sadd.s32 0, 0
      %s16 = smul.u32 4, %s15
      %s18 = ssub.s32 512, 512
      %19 = vsyncadd [#allocation3], %s18
      %s20 = smul.addr %s16, 128
      %s21 = scalar_lea.hbm %s0, %s20
      %s22 = sshll.u32 [#allocation2], 4
      %s23 = int_to_ptr.vmem [resolvable:$true] %s22
      %28 = dma.hbm_to_vmem [thread:$0]  %s21, 512, %s23, [#allocation3], 128, 128, 8
    $region5: #{tpu_custom_call.1} parent=1 // pred_fallthru
      _
    // Predicated region
    $region6: #{tpu_custom_call.1} parent=1 // pred_check
      _
    $region7: #{tpu_custom_call.1} parent=1 // pred_check_branch
      %30 = sbr.rel (0) target = $region9
    $region8: #{tpu_custom_call.1} parent=1 // pred_region
      %s31 = sadd.s32 0, 0
      %s32 = smul.u32 4, %s31
      %s34 = ssub.s32 512, 512
      %35 = vsyncadd [#allocation6], %s34
      %s36 = smul.addr %s32, 128
      %s37 = scalar_lea.hbm %s1, %s36
      %s38 = sshll.u32 [#allocation5], 4
      %s39 = int_to_ptr.vmem [resolvable:$true] %s38
      %44 = dma.hbm_to_vmem [thread:$0]  %s37, 512, %s39, [#allocation6], 128, 128, 8
    $region9: #{tpu_custom_call.1} parent=1 // pred_fallthru
      _
    // Predicated region
    $region10: #{tpu_custom_call.1} parent=1 // pred_check
      _
    $region11: #{tpu_custom_call.1} parent=1 // pred_check_branch
      %46 = sbr.rel (0) target = $region13
    $region12: #{tpu_custom_call.1} parent=1 // pred_region
      %47 = dma.done [#allocation3], 512
    $region13: #{tpu_custom_call.1} parent=1 // pred_fallthru
      _
    // Predicated region
    $region14: #{tpu_custom_call.1} parent=1 // pred_check
      _
    $region15: #{tpu_custom_call.1} parent=1 // pred_check_branch
      %49 = sbr.rel (0) target = $region17
    $region16: #{tpu_custom_call.1} parent=1 // pred_region
      %50 = dma.done [#allocation6], 512
    $region17: #{tpu_custom_call.1} parent=1 // pred_fallthru
      _
    %s51 = sadd.s32 0, 0
    %s52 = smul.u32 4, %s51
    %s53 = sadd.s32 0, 0
    %s54 = smul.u32 4, %s53
    %p55 = scmp.eq.s32.totalorder 0, 0
    // Predicated region
    $region18: #{tpu_custom_call.1} parent=1 // pred_check
      %p56 = pneg %p55
    $region19: #{tpu_custom_call.1} parent=1 // pred_check_branch
      %58 = sbr.rel (%p56) target = $region21
    $region20: #{tpu_custom_call.1} parent=1 // pred_region
      %59 = vst [vmem:[#allocation7] sm:$0xff] 0.0
      %60 = vst [vmem:[#allocation8] sm:$0xff] 0.0
    $region21: #{tpu_custom_call.1} parent=1 // pred_fallthru
      _
    %v61 = vld [vmem:[#allocation2] sm:$0xff]
    %v62 = vld [vmem:[#allocation2 + $0x8] sm:$0xff]
    %v63 = vld [vmem:[#allocation2 + $0x10] sm:$0xff]
    %v64 = vld [vmem:[#allocation2 + $0x18] sm:$0xff]
    %v65 = vld [vmem:[#allocation5] sm:$0xff]
    %v66 = vld [vmem:[#allocation5 + $0x8] sm:$0xff]
    %v67 = vld [vmem:[#allocation5 + $0x10] sm:$0xff]
    %v68 = vld [vmem:[#allocation5 + $0x18] sm:$0xff]
    %vm69 = vcmp.gt.f32.partialorder %v65, 0.5
    %vm70 = vcmp.gt.f32.partialorder %v66, 0.5
    %vm71 = vcmp.gt.f32.partialorder %v67, 0.5
    %vm72 = vcmp.gt.f32.partialorder %v68, 0.5
    %v73 = vsel %vm69, 1, 0
    %v74 = vsel %vm70, 1, 0
    %v75 = vsel %vm71, 1, 0
    %v76 = vsel %vm72, 1, 0
    %v77 = vcvt.s32.f32 %v73
    %v78 = vcvt.s32.f32 %v74
    %v79 = vcvt.s32.f32 %v75
    %v80 = vcvt.s32.f32 %v76
    %v81 = vmul.f32 %v61, 0.5
    %v82 = vmul.f32 %v62, 0.5
    %v83 = vmul.f32 %v63, 0.5
    %v84 = vmul.f32 %v64, 0.5
    %v85 = vtanh.pop %v81
    %v86 = vtanh.pop %v82
    %v87 = vtanh.pop %v83
    %v88 = vtanh.pop %v84
    %v89 = vadd.f32 %v85, 1.0
    %v90 = vadd.f32 %v86, 1.0
    %v91 = vadd.f32 %v87, 1.0
    %v92 = vadd.f32 %v88, 1.0
    %v93 = vmul.f32 %v89, 0.5
    %v94 = vmul.f32 %v90, 0.5
    %v95 = vmul.f32 %v91, 0.5
    %v96 = vmul.f32 %v92, 0.5
    %v97 = vmul.f32 %v93, %v77
    %v98 = vmul.f32 %v94, %v78
    %v99 = vmul.f32 %v95, %v79
    %v100 = vmul.f32 %v96, %v80
    %v101 = vadd.f32 %v97, %v98
    %v102 = vadd.f32 %v101, %v99
    %v103 = vadd.f32 %v102, %v100
    %v104 = vadd.f32 %v103, 0.0
    %v105 = vmul.f32 %v93, %v93
    %v106 = vmul.f32 %v94, %v94
    %v107 = vmul.f32 %v95, %v95
    %v108 = vmul.f32 %v96, %v96
    %v109 = vadd.f32 %v105, %v77
    %v110 = vadd.f32 %v106, %v78
    %v111 = vadd.f32 %v107, %v79
    %v112 = vadd.f32 %v108, %v80
    %v113 = vadd.f32 %v109, %v110
    %v114 = vadd.f32 %v113, %v111
    %v115 = vadd.f32 %v114, %v112
    %v116 = vadd.f32 %v115, 0.0
    %v117 = vld [vmem:[#allocation7] sm:$0xff]
    %v118 = vadd.f32 %v117, %v104
    %119 = vst [vmem:[#allocation7] sm:$0xff] %v118
    %v120 = vld [vmem:[#allocation8] sm:$0xff]
    %v121 = vadd.f32 %v120, %v116
    %122 = vst [vmem:[#allocation8] sm:$0xff] %v121
    // Predicated region
    $region22: #{tpu_custom_call.1} parent=1 // pred_check
      _
    $region23: #{tpu_custom_call.1} parent=1 // pred_check_branch
      %124 = sbr.rel (0) target = $region25
    $region24: #{tpu_custom_call.1} parent=1 // pred_region
      %s126 = ssub.s32 128, 128
      %127 = vsyncadd [#allocation4], %s126
      %s129 = sshll.u32 [#allocation7], 4
      %s130 = int_to_ptr.vmem [resolvable:$true] %s129
      %132 = dma.vmem_to_hbm [thread:$0]  %s130, 128, %s2, [#allocation4]
    $region25: #{tpu_custom_call.1} parent=1 // pred_fallthru
      _
    // Predicated region
    $region26: #{tpu_custom_call.1} parent=1 // pred_check
      _
    $region27: #{tpu_custom_call.1} parent=1 // pred_check_branch
      %134 = sbr.rel (0) target = $region29
    $region28: #{tpu_custom_call.1} parent=1 // pred_region
      %s136 = ssub.s32 128, 128
      %137 = vsyncadd [#allocation9], %s136
      %s139 = sshll.u32 [#allocation8], 4
      %s140 = int_to_ptr.vmem [resolvable:$true] %s139
      %142 = dma.vmem_to_hbm [thread:$0]  %s140, 128, %s3, [#allocation9]
    $region29: #{tpu_custom_call.1} parent=1 // pred_fallthru
      _
    // Predicated region
    $region30: #{tpu_custom_call.1} parent=1 // pred_check
      _
    $region31: #{tpu_custom_call.1} parent=1 // pred_check_branch
      %144 = sbr.rel (0) target = $region33
    $region32: #{tpu_custom_call.1} parent=1 // pred_region
      %145 = dma.done [#allocation4], 128
    $region33: #{tpu_custom_call.1} parent=1 // pred_fallthru
      _
    // Predicated region
    $region34: #{tpu_custom_call.1} parent=1 // pred_check
      _
    $region35: #{tpu_custom_call.1} parent=1 // pred_check_branch
      %147 = sbr.rel (0) target = $region37
    $region36: #{tpu_custom_call.1} parent=1 // pred_region
      %148 = dma.done [#allocation9], 128
    $region37: #{tpu_custom_call.1} parent=1 // pred_fallthru
      _
    %149 = vsyncpa [#allocation3], 1
    %150 = vsyncpa [#allocation6], 1
    %151 = vsyncpa [#allocation4], 1
    %152 = vsyncpa [#allocation9], 1

</llo_original>
